<compile_context>
chip_gen: v7x
topology: tpu7x:2x2x1
jax: 0.10.0
libtpu: 0.0.40
codegen_flags: <defaults>
</compile_context>

<pallas_src>
import functools

import jax
import jax.numpy as jnp
from jax.experimental import pallas as pl
from jax.experimental.pallas import tpu as pltpu


# --------------------------------------------------------------------------------------
# Kernel
# --------------------------------------------------------------------------------------
def _ce_kernel(logits_ref, labels_ref, loss_ref, count_ref,
               m_ref, l_ref, t_ref, *,
               ignore_index: int, n_valid_rows: int, v_total: int, needs_col_mask: bool):
    """One (row-block, vocab-block) step of next-token cross-entropy.

    logits_ref : (tm, tv) model dtype       labels_ref : (tm, 1) int32 (shifted & padded)
    loss_ref / count_ref : (1, 1, 128) f32 per-row-block partial sums (written on last k)
    m_ref / l_ref / t_ref : (tm, 1) f32 running max / sum-exp / target-logit scratch
    """
    i = pl.program_id(0)
    k = pl.program_id(1)
    nk = pl.num_programs(1)
    tm, tv = logits_ref.shape

    @pl.when(k == 0)
    def _init():
        m_ref[...] = jnp.full(m_ref.shape, -jnp.inf, jnp.float32)
        l_ref[...] = jnp.zeros(l_ref.shape, jnp.float32)
        t_ref[...] = jnp.zeros(t_ref.shape, jnp.float32)

    x = logits_ref[...].astype(jnp.float32)                      # (tm, tv) f32 math
    lab = labels_ref[...]                                        # (tm, 1) int32
    v_start = k * tv
    col = jax.lax.broadcasted_iota(jnp.int32, (tm, tv), 1)       # block-local columns

    if needs_col_mask:
        # Ragged last vocab block: neutralize columns past V for the running max / sum-exp.
        x = jnp.where(col < (v_total - v_start), x, -jnp.inf)

    # ---- online log-sum-exp over vocab blocks ----
    m_prev = m_ref[...]
    m_new = jnp.maximum(m_prev, jnp.max(x, axis=-1, keepdims=True))
    alpha = jnp.exp(m_prev - m_new)
    l_ref[...] = alpha * l_ref[...] + jnp.sum(jnp.exp(x - m_new), axis=-1, keepdims=True)
    m_ref[...] = m_new

    # ---- target logit: the label's column lies in exactly one vocab block ----
    # TODO(synk): for extremely large vocab a per-row gather from SMEM labels (128-lane
    # dynamic slice) would cut the remaining per-element compare/select VALU work further.
    t_ref[...] += jnp.sum(jnp.where(col == (lab - v_start), x, 0.0),
                          axis=-1, keepdims=True)

    # ---- finalize: lane-dense per-row-block partial loss sum + valid-token count ----
    @pl.when(k == nk - 1)
    def _finalize():
        row = jax.lax.broadcasted_iota(jnp.int32, (tm, 1), 0) + i * tm
        valid = (lab != ignore_index) & (row < n_valid_rows)     # (tm, 1) bool
        lse = m_ref[...] + jnp.log(l_ref[...])
        per_tok = jnp.where(valid, lse - t_ref[...], 0.0)        # masked rows contribute 0
        loss_ref[...] = jnp.full(loss_ref.shape, jnp.sum(per_tok), jnp.float32)
        count_ref[...] = jnp.full(count_ref.shape,
                                  jnp.sum(valid.astype(jnp.float32)), jnp.float32)


# --------------------------------------------------------------------------------------
# Tiling / budget helpers
# --------------------------------------------------------------------------------------
def _vmem_capacity_bytes() -> int:
    """Physical per-core VMEM; fall back to the smallest current part (v7x, 64 MiB)."""
    try:
        cap = int(pltpu.get_tpu_info().vmem_capacity_bytes)
        if cap >= (16 << 20):
            return cap
    except Exception:
        pass
    return 64 << 20


def _round_up(a: int, b: int) -> int:
    return -(-a // b) * b


def _choose_tiles(n_rows: int, vocab: int, itemsize: int, tile_budget: int):
    """Pick (tm, tv): row tile rounded to the dtype's sublane packing, vocab tile a multiple
    of 128 sized so double-buffered logits + ~20 B/elem of f32 temporaries fit the budget.
    tm is capped so there are >= 2 row blocks (v7x has 2 TensorCores on the parallel axis)."""
    pack = max(8, 32 // max(1, itemsize))          # f32 -> 8, bf16 -> 16, int8 -> 32
    bytes_per_elem = 2 * itemsize + 20             # dbl-buffered input + f32 temporaries

    tm = 256
    tm = min(tm, _round_up(n_rows, pack))          # never tile wider than the work
    if n_rows > pack:                              # keep >= 2 row blocks when possible
        tm = min(tm, _round_up(-(-n_rows // 2), pack))
    tm = max(pack, (tm // pack) * pack)

    tv = tile_budget // (tm * bytes_per_elem)
    while tv < 128 and tm > pack:                  # huge vocab: shrink rows before cols
        tm = max(pack, ((tm // 2) // pack) * pack)
        tv = tile_budget // (tm * bytes_per_elem)
    tv = max(128, (tv // 128) * 128)
    if tv >= vocab:
        tv = vocab                                 # single vocab block (full-dim is legal)
    return tm, tv


# --------------------------------------------------------------------------------------
# Wrapper
# --------------------------------------------------------------------------------------
def flash_gpt_lm_loss(logits: jax.Array, labels: jax.Array,
                      ignore_index: int = -100,
                      tm: int | None = None, tv: int | None = None) -> jax.Array:
    """Pallas equivalent of FlashGPTLMLoss.forward(logits[T, V], labels[T])."""
    T, V = logits.shape
    n = T - 1                                      # number of (logit, next-label) pairs
    assert n >= 1, "need at least 2 tokens"
    itemsize = jnp.dtype(logits.dtype).itemsize

    # Generation-aware VMEM budgets (≈52/28 MiB on 64-MiB v7x, ≈100/60 MiB on 128-MiB v5e/v6e).
    vmem_cap = _vmem_capacity_bytes()
    vmem_limit = max(32 << 20, min(vmem_cap - (12 << 20), 100 << 20))
    tile_budget = (28 << 20) if vmem_cap <= (64 << 20) else (64 << 20)
    tile_budget = min(tile_budget, (vmem_limit * 3) // 5)

    auto_tm, auto_tv = _choose_tiles(n, V, itemsize, tile_budget)
    if tm is None:
        tm = auto_tm
    if tv is None:
        tv = auto_tv
    if tv >= V:
        tv = V
    assert tm % 8 == 0, "row tile must be a multiple of 8"
    assert tv == V or tv % 128 == 0, "vocab tile must be a multiple of 128 (or all of V)"

    nb = -(-n // tm)                               # row blocks
    nk = -(-V // tv)                               # vocab blocks (reduction axis)
    n_pad = nb * tm
    needs_col_mask = (tv != V) and (V % tv != 0)

    # Only the tiny label vector is shifted / padded host-side; ignore_index padding masks
    # both the dropped last logits row and any ragged-row-block rows.
    shift_labels = labels[1:].astype(jnp.int32)
    shift_labels = jnp.pad(shift_labels, ((0, n_pad - n),), constant_values=ignore_index)
    labels2d = shift_labels.reshape(n_pad, 1)

    kernel = functools.partial(
        _ce_kernel, ignore_index=ignore_index, n_valid_rows=n,
        v_total=V, needs_col_mask=needs_col_mask)

    loss_part, count_part = pl.pallas_call(
        kernel,
        out_shape=(
            jax.ShapeDtypeStruct((nb, 1, 128), jnp.float32),   # per-row-block loss sums
            jax.ShapeDtypeStruct((nb, 1, 128), jnp.float32),   # per-row-block valid counts
        ),
        grid_spec=pltpu.PrefetchScalarGridSpec(
            num_scalar_prefetch=0,
            grid=(nb, nk),                                     # reduction (vocab) axis last
            in_specs=[
                pl.BlockSpec((tm, tv), lambda i, k: (i, k)),   # full, un-sliced logits
                pl.BlockSpec((tm, 1), lambda i, k: (i, 0)),    # shifted + padded labels
            ],
            out_specs=(
                pl.BlockSpec((1, 1, 128), lambda i, k: (i, 0, 0)),
                pl.BlockSpec((1, 1, 128), lambda i, k: (i, 0, 0)),
            ),
            scratch_shapes=[
                pltpu.VMEM((tm, 1), jnp.float32),              # running max
                pltpu.VMEM((tm, 1), jnp.float32),              # running sum-exp
                pltpu.VMEM((tm, 1), jnp.float32),              # target logit accumulator
            ]),
        compiler_params=pltpu.CompilerParams(
            dimension_semantics=("parallel", "arbitrary"),
            vmem_limit_bytes=int(vmem_limit)),
    )(logits, labels2d)

    # Tiny (nb,)-sized final reduction (and mean) in plain JAX.
    return jnp.sum(loss_part[:, 0, 0]) / jnp.sum(count_part[:, 0, 0])


# --------------------------------------------------------------------------------------
# Reference + tests
# --------------------------------------------------------------------------------------
def _reference_loss(logits, labels, ignore_index=-100):
    shift_logits = logits[:-1, :].astype(jnp.float32)
    shift_labels = labels[1:]
    lse = jax.scipy.special.logsumexp(shift_logits, axis=-1)
    tgt = jnp.take_along_axis(
        shift_logits, jnp.clip(shift_labels, 0)[:, None].astype(jnp.int32), axis=-1)[:, 0]
    valid = shift_labels != ignore_index
    per = jnp.where(valid, lse - tgt, 0.0)
    return jnp.sum(per) / jnp.sum(valid.astype(jnp.float32))


if __name__ == "__main__":
    key = jax.random.PRNGKey(0)

    def _run_case(case_key, T, V, dtype, ignore_at, tol, **tiles):
        k1, k2 = jax.random.split(case_key)
        logits = jax.random.normal(k1, (T, V), dtype=jnp.float32).astype(dtype)
        labels = jax.random.randint(k2, (T,), 0, V, dtype=jnp.int32)
        for pos in ignore_at:
            labels = labels.at[pos].set(-100)
        loss = jax.block_until_ready(flash_gpt_lm_loss(logits, labels, **tiles))
        ref = _reference_loss(logits, labels)
        assert jnp.isfinite(loss), loss
        assert jnp.allclose(loss, ref, atol=tol, rtol=tol), (loss, ref)

    keys = jax.random.split(key, 5)

    # 1) small f32, auto tiles, single vocab block
    _run_case(keys[0], 16, 128, jnp.float32, (3, 10), 1e-5)
    # 2) multiple + ragged row blocks (explicit tm), single vocab block
    _run_case(keys[1], 301, 256, jnp.float32, (7, 150, 299), 1e-5, tm=64)
    # 3) bf16 logits stay bf16 in HBM; f32 math in-kernel
    _run_case(keys[2], 64, 256, jnp.bfloat16, (0, 33), 1e-4)
    # 4) multiple vocab blocks -> online logsumexp path, ragged last vocab block (col mask)
    _run_case(keys[3], 40, 320, jnp.float32, (5, 21), 1e-5, tm=16, tv=128)
    # 5) multiple vocab blocks, vocab divisible by the tile (no column mask)
    _run_case(keys[4], 33, 384, jnp.float32, (2,), 1e-5, tv=128)

    print("KERNEL_OK")
</pallas_src>

<mosaic_0001>
module attributes {stable_mosaic.version = 11 : i64} {
  func.func @_ce_kernel(%arg0: i32, %arg1: i32, %arg2: memref<8x128xf32, #tpu.memory_space<vmem>>, %arg3: memref<8x1xi32, #tpu.memory_space<vmem>>, %arg4: memref<1x1x128xf32, #tpu.memory_space<vmem>>, %arg5: memref<1x1x128xf32, #tpu.memory_space<vmem>>, %arg6: memref<8x1xf32, #tpu.memory_space<vmem>>, %arg7: memref<8x1xf32, #tpu.memory_space<vmem>>, %arg8: memref<8x1xf32, #tpu.memory_space<vmem>>) attributes {dimension_semantics = [#tpu.dimension_semantics<parallel>, #tpu.dimension_semantics<arbitrary>], iteration_bounds = array<i64: 2, 1>, scalar_prefetch = 0 : i64, scratch_operands = 3 : i64, tpu.core_type = #tpu.core_type<tc>, window_params = [{transform_indices = @transform_0, window_bounds = array<i64: 8, 128>}, {transform_indices = @transform_1, window_bounds = array<i64: 8, 1>}, {transform_indices = @transform_2, window_bounds = array<i64: 1, 1, 128>}, {transform_indices = @transform_3, window_bounds = array<i64: 1, 1, 128>}]} {
    %c0_i32 = arith.constant 0 : i32
    %0 = arith.cmpi eq, %arg1, %c0_i32 : i32
    %1 = arith.extui %0 : i1 to i32
    %c0_i32_0 = arith.constant 0 : i32
    %2 = arith.cmpi ne, %1, %c0_i32_0 : i32
    scf.if %2 {
      %cst_21 = arith.constant 0xFF800000 : f32
      %37 = vector.broadcast %cst_21 : f32 to vector<8x1xf32>
      %c0_22 = arith.constant 0 : index
      %c0_23 = arith.constant 0 : index
      %38 = vector.load %arg6[%c0_22, %c0_23] : memref<8x1xf32, #tpu.memory_space<vmem>>, vector<8x1xf32>
      tpu.vector_store %arg6[%c0_22, %c0_23], %37 {strides = array<i32>} : memref<8x1xf32, #tpu.memory_space<vmem>>, vector<8x1xf32>,
      %cst_24 = arith.constant 0.000000e+00 : f32
      %39 = vector.broadcast %cst_24 : f32 to vector<8x1xf32>
      %c0_25 = arith.constant 0 : index
      %c0_26 = arith.constant 0 : index
      %40 = vector.load %arg7[%c0_25, %c0_26] : memref<8x1xf32, #tpu.memory_space<vmem>>, vector<8x1xf32>
      tpu.vector_store %arg7[%c0_25, %c0_26], %39 {strides = array<i32>} : memref<8x1xf32, #tpu.memory_space<vmem>>, vector<8x1xf32>,
      %cst_27 = arith.constant 0.000000e+00 : f32
      %41 = vector.broadcast %cst_27 : f32 to vector<8x1xf32>
      %c0_28 = arith.constant 0 : index
      %c0_29 = arith.constant 0 : index
      %42 = vector.load %arg8[%c0_28, %c0_29] : memref<8x1xf32, #tpu.memory_space<vmem>>, vector<8x1xf32>
      tpu.vector_store %arg8[%c0_28, %c0_29], %41 {strides = array<i32>} : memref<8x1xf32, #tpu.memory_space<vmem>>, vector<8x1xf32>,
    } else {
    }
    %c0 = arith.constant 0 : index
    %c0_1 = arith.constant 0 : index
    %3 = vector.load %arg2[%c0, %c0_1] : memref<8x128xf32, #tpu.memory_space<vmem>>, vector<8x128xf32>
    %c0_2 = arith.constant 0 : index
    %c0_3 = arith.constant 0 : index
    %4 = vector.load %arg3[%c0_2, %c0_3] : memref<8x1xi32, #tpu.memory_space<vmem>>, vector<8x1xi32>
    %c128_i32 = arith.constant 128 : i32
    %5 = arith.muli %arg1, %c128_i32 : i32
    %6 = tpu.iota {dimensions = array<i32: 1>} : vector<8x128xi32>
    %c0_4 = arith.constant 0 : index
    %c0_5 = arith.constant 0 : index
    %7 = vector.load %arg6[%c0_4, %c0_5] : memref<8x1xf32, #tpu.memory_space<vmem>>, vector<8x1xf32>
    %cst = arith.constant dense<0xFF800000> : vector<8xf32>
    %8 = vector.multi_reduction <maximumf>, %3, %cst [1] : vector<8x128xf32> to vector<8xf32>
    %9 = vector.shape_cast %8 : vector<8xf32> to vector<8x1xf32>
    %10 = arith.maximumf %7, %9 : vector<8x1xf32>
    %11 = arith.subf %7, %10 : vector<8x1xf32>
    %12 = math.exp %11 : vector<8x1xf32>
    %c0_6 = arith.constant 0 : index
    %c0_7 = arith.constant 0 : index
    %13 = vector.load %arg7[%c0_6, %c0_7] : memref<8x1xf32, #tpu.memory_space<vmem>>, vector<8x1xf32>
    %14 = arith.mulf %12, %13 : vector<8x1xf32>
    %15 = vector.broadcast %10 : vector<8x1xf32> to vector<8x128xf32>
    %16 = arith.subf %3, %15 : vector<8x128xf32>
    %17 = math.exp %16 : vector<8x128xf32>
    %cst_8 = arith.constant dense<0.000000e+00> : vector<8xf32>
    %18 = vector.multi_reduction <add>, %17, %cst_8 [1] : vector<8x128xf32> to vector<8xf32>
    %19 = vector.shape_cast %18 : vector<8xf32> to vector<8x1xf32>
    %20 = arith.addf %14, %19 : vector<8x1xf32>
    %c0_9 = arith.constant 0 : index
    %c0_10 = arith.constant 0 : index
    %21 = vector.load %arg7[%c0_9, %c0_10] : memref<8x1xf32, #tpu.memory_space<vmem>>, vector<8x1xf32>
    tpu.vector_store %arg7[%c0_9, %c0_10], %20 {strides = array<i32>} : memref<8x1xf32, #tpu.memory_space<vmem>>, vector<8x1xf32>,
    %c0_11 = arith.constant 0 : index
    %c0_12 = arith.constant 0 : index
    %22 = vector.load %arg6[%c0_11, %c0_12] : memref<8x1xf32, #tpu.memory_space<vmem>>, vector<8x1xf32>
    tpu.vector_store %arg6[%c0_11, %c0_12], %10 {strides = array<i32>} : memref<8x1xf32, #tpu.memory_space<vmem>>, vector<8x1xf32>,
    %c0_13 = arith.constant 0 : index
    %c0_14 = arith.constant 0 : index
    %23 = vector.load %arg8[%c0_13, %c0_14] : memref<8x1xf32, #tpu.memory_space<vmem>>, vector<8x1xf32>
    %24 = vector.broadcast %5 : i32 to vector<8x1xi32>
    %25 = arith.subi %4, %24 : vector<8x1xi32>
    %26 = vector.broadcast %25 : vector<8x1xi32> to vector<8x128xi32>
    %27 = arith.cmpi eq, %6, %26 : vector<8x128xi32>
    %cst_15 = arith.constant 0.000000e+00 : f32
    %28 = vector.broadcast %cst_15 : f32 to vector<8x128xf32>
    %29 = arith.select %27, %3, %28 : vector<8x128xi1>, vector<8x128xf32>
    %cst_16 = arith.constant dense<0.000000e+00> : vector<8xf32>
    %30 = vector.multi_reduction <add>, %29, %cst_16 [1] : vector<8x128xf32> to vector<8xf32>
    %31 = vector.shape_cast %30 : vector<8xf32> to vector<8x1xf32>
    %32 = arith.addf %23, %31 : vector<8x1xf32>
    %c0_17 = arith.constant 0 : index
    %c0_18 = arith.constant 0 : index
    %33 = vector.load %arg8[%c0_17, %c0_18] : memref<8x1xf32, #tpu.memory_space<vmem>>, vector<8x1xf32>
    tpu.vector_store %arg8[%c0_17, %c0_18], %32 {strides = array<i32>} : memref<8x1xf32, #tpu.memory_space<vmem>>, vector<8x1xf32>,
    %c0_i32_19 = arith.constant 0 : i32
    %34 = arith.cmpi eq, %arg1, %c0_i32_19 : i32
    %35 = arith.extui %34 : i1 to i32
    %c0_i32_20 = arith.constant 0 : i32
    %36 = arith.cmpi ne, %35, %c0_i32_20 : i32
    scf.if %36 {
      %37 = tpu.iota {dimensions = array<i32: 0>} : vector<8x1xi32>
      %c8_i32 = arith.constant 8 : i32
      %38 = arith.muli %arg0, %c8_i32 : i32
      %39 = vector.broadcast %38 : i32 to vector<8x1xi32>
      %40 = arith.addi %37, %39 : vector<8x1xi32>
      %c-100_i32 = arith.constant -100 : i32
      %41 = vector.broadcast %c-100_i32 : i32 to vector<8x1xi32>
      %42 = arith.cmpi ne, %4, %41 : vector<8x1xi32>
      %c15_i32 = arith.constant 15 : i32
      %43 = vector.broadcast %c15_i32 : i32 to vector<8x1xi32>
      %44 = arith.cmpi slt, %40, %43 : vector<8x1xi32>
      %45 = arith.andi %42, %44 : vector<8x1xi1>
      %c0_21 = arith.constant 0 : index
      %c0_22 = arith.constant 0 : index
      %46 = vector.load %arg6[%c0_21, %c0_22] : memref<8x1xf32, #tpu.memory_space<vmem>>, vector<8x1xf32>
      %c0_23 = arith.constant 0 : index
      %c0_24 = arith.constant 0 : index
      %47 = vector.load %arg7[%c0_23, %c0_24] : memref<8x1xf32, #tpu.memory_space<vmem>>, vector<8x1xf32>
      %48 = math.log %47 : vector<8x1xf32>
      %49 = arith.addf %46, %48 : vector<8x1xf32>
      %c0_25 = arith.constant 0 : index
      %c0_26 = arith.constant 0 : index
      %50 = vector.load %arg8[%c0_25, %c0_26] : memref<8x1xf32, #tpu.memory_space<vmem>>, vector<8x1xf32>
      %51 = arith.subf %49, %50 : vector<8x1xf32>
      %cst_27 = arith.constant 0.000000e+00 : f32
      %52 = vector.broadcast %cst_27 : f32 to vector<8x1xf32>
      %53 = arith.select %45, %51, %52 : vector<8x1xi1>, vector<8x1xf32>
      %54 = vector.shape_cast %53 : vector<8x1xf32> to vector<1x8x1xf32>
      %cst_28 = arith.constant dense<0.000000e+00> : vector<1xf32>
      %55 = vector.multi_reduction <add>, %54, %cst_28 [1, 2] : vector<1x8x1xf32> to vector<1xf32>
      %56 = vector.shape_cast %55 : vector<1xf32> to vector<1x1x1xf32>
      %57 = vector.extract %56[0, 0, 0] : f32 from vector<1x1x1xf32>
      %58 = vector.broadcast %57 : f32 to vector<1x1x128xf32>
      %c0_29 = arith.constant 0 : index
      %c0_30 = arith.constant 0 : index
      %c0_31 = arith.constant 0 : index
      %59 = vector.load %arg4[%c0_29, %c0_30, %c0_31] : memref<1x1x128xf32, #tpu.memory_space<vmem>>, vector<1x1x128xf32>
      tpu.vector_store %arg4[%c0_29, %c0_30, %c0_31], %58 {strides = array<i32>} : memref<1x1x128xf32, #tpu.memory_space<vmem>>, vector<1x1x128xf32>,
      %60 = arith.extui %45 : vector<8x1xi1> to vector<8x1xi32>
      %61 = arith.sitofp %60 : vector<8x1xi32> to vector<8x1xf32>
      %62 = vector.shape_cast %61 : vector<8x1xf32> to vector<1x8x1xf32>
      %cst_32 = arith.constant dense<0.000000e+00> : vector<1xf32>
      %63 = vector.multi_reduction <add>, %62, %cst_32 [1, 2] : vector<1x8x1xf32> to vector<1xf32>
      %64 = vector.shape_cast %63 : vector<1xf32> to vector<1x1x1xf32>
      %65 = vector.extract %64[0, 0, 0] : f32 from vector<1x1x1xf32>
      %66 = vector.broadcast %65 : f32 to vector<1x1x128xf32>
      %c0_33 = arith.constant 0 : index
      %c0_34 = arith.constant 0 : index
      %c0_35 = arith.constant 0 : index
      %67 = vector.load %arg5[%c0_33, %c0_34, %c0_35] : memref<1x1x128xf32, #tpu.memory_space<vmem>>, vector<1x1x128xf32>
      tpu.vector_store %arg5[%c0_33, %c0_34, %c0_35], %66 {strides = array<i32>} : memref<1x1x128xf32, #tpu.memory_space<vmem>>, vector<1x1x128xf32>,
    } else {
    }
    return
  }
  func.func @transform_0(%arg0: i32, %arg1: i32) -> (i32, i32) {
    %c0_i32 = arith.constant 0 : i32
    return %arg0, %arg1 : i32, i32
  }
  func.func @transform_1(%arg0: i32, %arg1: i32) -> (i32, i32) {
    %c0_i32 = arith.constant 0 : i32
    %c0_i32_0 = arith.constant 0 : i32
    return %arg0, %c0_i32 : i32, i32
  }
  func.func @transform_2(%arg0: i32, %arg1: i32) -> (i32, i32, i32) {
    %c0_i32 = arith.constant 0 : i32
    %c0_i32_0 = arith.constant 0 : i32
    %c0_i32_1 = arith.constant 0 : i32
    return %arg0, %c0_i32, %c0_i32_0 : i32, i32, i32
  }
  func.func @transform_3(%arg0: i32, %arg1: i32) -> (i32, i32, i32) {
    %c0_i32 = arith.constant 0 : i32
    %c0_i32_0 = arith.constant 0 : i32
    %c0_i32_1 = arith.constant 0 : i32
    return %arg0, %c0_i32, %c0_i32_0 : i32, i32, i32
  }
}

</mosaic_0001>

<llo_original>
// kernel: tpu_custom_call.1
$region0: #{tpu_custom_call.1}
  #allocation0 [shape = 'u32[]', space=smem, size = 0x4, offset = 0x4, fixed_abs, tag = 'smem constant byte address 0x4 - core index']
  #allocation1 [shape = 'u32[144,128]{1,0:T(1,128)}', space=vmem, size = 0x12000, scoped, tag = 'internal scratch']
  #allocation2 [shape = 'f32[8,1]{1,0:T(8,128)}', space=vmem, size = 0x1000, scoped, tag = 'scratch operand']
  #allocation3 [shape = 'f32[8,1]{1,0:T(8,128)}', space=vmem, size = 0x1000, scoped, tag = 'scratch operand']
  #allocation4 [shape = 'f32[8,1]{1,0:T(8,128)}', space=vmem, size = 0x1000, scoped, tag = 'scratch operand']
  %s0 = inlined_call_operand.vmem [shape: f32[16,128], index: 0, kind: input, shape index: {}]
  %s1 = inlined_call_operand.vmem [shape: s32[16,1], index: 1, kind: input, shape index: {}]
  %s2 = inlined_call_operand.hbm [shape: f32[2,1,128], index: 2, kind: output, shape index: {0}]
  %s3 = inlined_call_operand.hbm [shape: f32[2,1,128], index: 3, kind: output, shape index: {1}]
  %4 = xla_tuple %s2, %s3
  %s5 = sld [smem:[#allocation0]]
  $region57: #{tpu_custom_call.1} parent=0
    _
  %s7 = ssub.s32 1, %s5
  %s8 = scalar_select 0, %s7, %s5
  $region1: #{tpu_custom_call.1} parent=0
    #allocation5 [shape = 'u8[1024]{0}', space=vmem, size = 0x400, scoped, tag = 'output window, operand 0']
    #allocation6 [shape = 's32[2]{0}', space=sflag, size = 0x8, scoped, tag = 'scoped memory for tpu_custom_call.1']
    #allocation7 [shape = 'u8[1024]{0}', space=vmem, size = 0x400, scoped, tag = 'output window, operand 1']
    #allocation8 [shape = 's32[2]{0}', space=sflag, size = 0x8, scoped, tag = 'scoped memory for tpu_custom_call.1']
    %9 = vsyncpa [#allocation6], 0
    %s10 = scalar_lea.sflag [#allocation6], 1
    %11 = vsyncpa %s10, 0
    %12 = vsyncpa [#allocation8], 0
    %s13 = scalar_lea.sflag [#allocation8], 1
    %14 = vsyncpa %s13, 0
    loop: start=0, step=1, limit=4
    $region2: #{tpu_custom_call.1} parent=1 // loop_pre_header
      _
    $region3: #{tpu_custom_call.1} parent=1 // loop_header
      %s16 = sphi 0, %s20
      %p17 = scmp.ge.s32.totalorder %s16, 4
      %s23 = sphi 0, %s35
      %s24 = sphi 0, %s31
      %s25 = sphi 0, %s23
      %s26 = sphi 0, %s24
      %s27 = sphi 0, %s25
      %s28 = sphi 0, %s26
      %s40 = sphi 0, %s42
      %s43 = sphi 0, %s40
      %s44 = sphi 0, %s43
      %s60 = sphi 0, %s44
      %s66 = sphi 0, %s68
      %s69 = sphi 0, %s66
      %s70 = sphi 0, %s69
      %s86 = sphi 0, %s70
      %s92 = sphi 0, %s94
      %s95 = sphi 0, %s92
      %s96 = sphi 0, %s95
      %s112 = sphi 0, %s96
      %s118 = sphi 0, %s120
      %s121 = sphi 0, %s118
      %s122 = sphi 0, %s121
      %s138 = sphi 0, %s122
    $region4: #{tpu_custom_call.1} parent=1 // loop_header_branch
      %19 = sbr.rel (%p17) target = $region8
    $region5: #{tpu_custom_call.1} parent=1 // loop_body
      %s21 = ssub.s32 %s16, 1
      %s22 = ssub.s32 %s16, 2
      %s29 = sadd.s32 1, %s24
      %p30 = scmp.ge.s32.totalorder %s29, 1
      %s31 = scalar_select %p30, 0, %s29
      %s32 = sadd.s32 1, %s23
      %s33 = scalar_select %p30, %s32, %s23
      %p34 = scmp.ge.s32.totalorder %s33, 2
      %s35 = scalar_select %p34, 0, %s33
      %s36 = ssub.s32 %s23, %s35
      %s37 = ssub.s32 %s24, %s31
      %s38 = sor.u32 %s36, %s37
      %p39 = scmp.eq.s32.totalorder %s38, 0
      %s41 = sadd.s32 %s40, 1
      %s42 = scalar_select %p39, %s40, %s41
      %p45 = pneg %p39
      %p46 = scmp.eq.s32.totalorder %s16, 1
      %p47 = por %p45, %p46
      %p48 = scmp.ne.s32.totalorder %s40, %s43
      %p49 = scmp.eq.s32.totalorder %s16, 0
      %p50 = por %p48, %p49
      %p51 = scmp.ne.s32.totalorder %s40, %s43
      %p52 = scmp.eq.s32.totalorder %s21, 1
      %p53 = por %p51, %p52
      %p54 = scmp.ne.s32.totalorder %s43, %s44
      %p55 = scmp.eq.s32.totalorder %s21, 0
      %p56 = por %p54, %p55
      %p57 = scmp.ne.s32.totalorder %s43, %s44
      %p58 = scmp.eq.s32.totalorder %s22, 1
      %p59 = por %p57, %p58
      %p61 = scmp.ne.s32.totalorder %s44, %s60
      %p62 = scmp.eq.s32.totalorder %s22, 0
      %p63 = por %p61, %p62
      %s64 = ssub.s32 %s23, %s35
      %p65 = scmp.eq.s32.totalorder %s64, 0
      %s67 = sadd.s32 %s66, 1
      %s68 = scalar_select %p65, %s66, %s67
      %p71 = pneg %p65
      %p72 = scmp.eq.s32.totalorder %s16, 1
      %p73 = por %p71, %p72
      %p74 = scmp.ne.s32.totalorder %s66, %s69
      %p75 = scmp.eq.s32.totalorder %s16, 0
      %p76 = por %p74, %p75
      %p77 = scmp.ne.s32.totalorder %s66, %s69
      %p78 = scmp.eq.s32.totalorder %s21, 1
      %p79 = por %p77, %p78
      %p80 = scmp.ne.s32.totalorder %s69, %s70
      %p81 = scmp.eq.s32.totalorder %s21, 0
      %p82 = por %p80, %p81
      %p83 = scmp.ne.s32.totalorder %s69, %s70
      %p84 = scmp.eq.s32.totalorder %s22, 1
      %p85 = por %p83, %p84
      %p87 = scmp.ne.s32.totalorder %s70, %s86
      %p88 = scmp.eq.s32.totalorder %s22, 0
      %p89 = por %p87, %p88
      %s90 = ssub.s32 %s23, %s35
      %p91 = scmp.eq.s32.totalorder %s90, 0
      %s93 = sadd.s32 %s92, 1
      %s94 = scalar_select %p91, %s92, %s93
      %p97 = pneg %p91
      %p98 = scmp.eq.s32.totalorder %s16, 1
      %p99 = por %p97, %p98
      %p100 = scmp.ne.s32.totalorder %s92, %s95
      %p101 = scmp.eq.s32.totalorder %s16, 0
      %p102 = por %p100, %p101
      %p103 = scmp.ne.s32.totalorder %s92, %s95
      %p104 = scmp.eq.s32.totalorder %s21, 1
      %p105 = por %p103, %p104
      %p106 = scmp.ne.s32.totalorder %s95, %s96
      %p107 = scmp.eq.s32.totalorder %s21, 0
      %p108 = por %p106, %p107
      %p109 = scmp.ne.s32.totalorder %s95, %s96
      %p110 = scmp.eq.s32.totalorder %s22, 1
      %p111 = por %p109, %p110
      %p113 = scmp.ne.s32.totalorder %s96, %s112
      %p114 = scmp.eq.s32.totalorder %s22, 0
      %p115 = por %p113, %p114
      %s116 = ssub.s32 %s23, %s35
      %p117 = scmp.eq.s32.totalorder %s116, 0
      %s119 = sadd.s32 %s118, 1
      %s120 = scalar_select %p117, %s118, %s119
      %p123 = pneg %p117
      %p124 = scmp.eq.s32.totalorder %s16, 1
      %p125 = por %p123, %p124
      %p126 = scmp.ne.s32.totalorder %s118, %s121
      %p127 = scmp.eq.s32.totalorder %s16, 0
      %p128 = por %p126, %p127
      %p129 = scmp.ne.s32.totalorder %s118, %s121
      %p130 = scmp.eq.s32.totalorder %s21, 1
      %p131 = por %p129, %p130
      %p132 = scmp.ne.s32.totalorder %s121, %s122
      %p133 = scmp.eq.s32.totalorder %s21, 0
      %p134 = por %p132, %p133
      %p135 = scmp.ne.s32.totalorder %s121, %s122
      %p136 = scmp.eq.s32.totalorder %s22, 1
      %p137 = por %p135, %p136
      %p139 = scmp.ne.s32.totalorder %s122, %s138
      %p140 = scmp.eq.s32.totalorder %s22, 0
      %p141 = por %p139, %p140
      %p142 = scmp.le.s32.totalorder 1, %s16
      %p143 = scmp.lt.s32.totalorder %s16, 3
      %p144 = pnand %p142, %p143
      %p145 = pneg %p144
      // Predicated region
      $region9: #{tpu_custom_call.1} parent=5 // pred_check
        _
      $region10: #{tpu_custom_call.1} parent=5 // pred_check_branch
        %147 = sbr.rel (%p144) target = $region12
      $region11: #{tpu_custom_call.1} parent=5 // pred_region
        %s148 = ssub.s32 %s16, 1
      $region12: #{tpu_custom_call.1} parent=5 // pred_fallthru
        _
      %p149 = scmp.lt.s32.totalorder %s16, 2
      // Predicated region
      $region13: #{tpu_custom_call.1} parent=5 // pred_check
        %p150 = pneg %p149
      $region14: #{tpu_custom_call.1} parent=5 // pred_check_branch
        %152 = sbr.rel (%p150) target = $region16
      $region15: #{tpu_custom_call.1} parent=5 // pred_region
        // Predicated region
        $region17: #{tpu_custom_call.1} parent=15 // pred_check
          %p153 = pneg %p50
        $region18: #{tpu_custom_call.1} parent=15 // pred_check_branch
          %155 = sbr.rel (%p153) target = $region20
        $region19: #{tpu_custom_call.1} parent=15 // pred_region
          %p156 = scmp.lt.s32.totalorder %s23, 1
          %s157 = scalar_select %p156, %s23, 1
          %p158 = scmp.lt.s32.totalorder %s24, 0
          %s159 = scalar_select %p158, %s24, 0
          %s160 = sadd.s32 %s159, %s157
          %s161 = smul.addr %s160, 8
          %s162 = scalar_lea.vmem %s0, %s161
        $region20: #{tpu_custom_call.1} parent=15 // pred_fallthru
          _
        // Predicated region
        $region21: #{tpu_custom_call.1} parent=15 // pred_check
          %p163 = pneg %p76
        $region22: #{tpu_custom_call.1} parent=15 // pred_check_branch
          %165 = sbr.rel (%p163) target = $region24
        $region23: #{tpu_custom_call.1} parent=15 // pred_region
          %p166 = scmp.lt.s32.totalorder %s23, 1
          %s167 = scalar_select %p166, %s23, 1
          %s168 = smul.addr %s167, 8
          %s169 = scalar_lea.vmem %s1, %s168
        $region24: #{tpu_custom_call.1} parent=15 // pred_fallthru
          _
      $region16: #{tpu_custom_call.1} parent=5 // pred_fallthru
        _
      %p170 = scmp.le.s32.totalorder 1, %s16
      %p171 = scmp.lt.s32.totalorder %s16, 3
      %p172 = pnand %p170, %p171
      %p173 = pneg %p172
      // Predicated region
      $region25: #{tpu_custom_call.1} parent=5 // pred_check
        _
      $region26: #{tpu_custom_call.1} parent=5 // pred_check_branch
        %175 = sbr.rel (%p172) target = $region28
      $region27: #{tpu_custom_call.1} parent=5 // pred_region
        %s176 = ssub.s32 %s16, 1
        %p177 = scmp.lt.s32.totalorder %s25, 1
        %s178 = scalar_select %p177, %s25, 1
        %p179 = scmp.lt.s32.totalorder %s26, 0
        %s180 = scalar_select %p179, %s26, 0
        %s181 = sadd.s32 %s180, %s178
        %s182 = smul.addr %s181, 8
        %s183 = scalar_lea.vmem %s0, %s182
        %p184 = pneg %p56
        %p185 = pneg %p53
        %p186 = scmp.lt.s32.totalorder %s25, 1
        %s187 = scalar_select %p186, %s25, 1
        %s188 = smul.addr %s187, 8
        %s189 = scalar_lea.vmem %s1, %s188
        %p190 = pneg %p82
        %p191 = pneg %p79
        %p192 = pneg %p108
        %p193 = pneg %p105
        %s194 = sand.u32 %s95, 1
        %s195 = scalar_lea.sflag [#allocation6], %s194
        %s196 = sand.u32 %s95, 1
        %s197 = scalar_lea.vmem [#allocation5], %s196
        %p198 = pneg %p134
        %p199 = pneg %p131
        %s200 = sand.u32 %s121, 1
        %s201 = scalar_lea.sflag [#allocation8], %s200
        %s202 = sand.u32 %s121, 1
        %s203 = scalar_lea.vmem [#allocation7], %s202
        %p204 = scmp.lt.s32.totalorder %s25, 1
        %s205 = scalar_select %p204, %s25, 1
        %p206 = scmp.lt.s32.totalorder %s26, 0
        %s207 = scalar_select %p206, %s26, 0
        %s208 = sadd.s32 %s207, %s205
        %s209 = smul.addr %s208, 8
        %s210 = scalar_lea.vmem %s0, %s209
        %p211 = scmp.lt.s32.totalorder %s25, 1
        %s212 = scalar_select %p211, %s25, 1
        %s213 = smul.addr %s212, 8
        %s214 = scalar_lea.vmem %s1, %s213
        %p215 = scmp.eq.s32.totalorder %s26, 0
        // Predicated region
        $region29: #{tpu_custom_call.1} parent=27 // pred_check
          %p216 = pneg %p215
        $region30: #{tpu_custom_call.1} parent=27 // pred_check_branch
          %218 = sbr.rel (%p216) target = $region32
        $region31: #{tpu_custom_call.1} parent=27 // pred_region
          %vm219 = vcmask 7168
          %220 = vst.msk [vmem:[#allocation2] sm:$0xff] %vm219, -inf
          %221 = vst.msk [vmem:[#allocation3] sm:$0xff] %vm219, 0.0
          %222 = vst.msk [vmem:[#allocation4] sm:$0xff] %vm219, 0.0
        $region32: #{tpu_custom_call.1} parent=27 // pred_fallthru
          _
        %v223 = vld [vmem:[%s210] sm:$0xff]
        %v224 = vld [vmem:[%s214] sm:$0xff]
        %s225 = smul.u32 %s26, 128
        %v226 = vlaneseq
        %v227 = vand.u32 %v226, 127
        %v228 = vld [vmem:[#allocation2] sm:$0xff]
        %229 = vmax.xlane.f32.xlu0 %v223
        %v230 = vpop.xlane.xlu0 %229
        %v231 = vmax.f32 %v228, %v230
        %v232 = vsub.f32 %v228, %v231
        %v233 = vmul.f32 %v232, 1.442695
        %v234 = vpow.pop %v233
        %v235 = vld [vmem:[#allocation3] sm:$0xff]
        %v236 = vmul.f32 %v234, %v235
        %238 = vset.pattern.permute.xlu0 0
        %239 = vperm.xlu0 %238, %v231
        %v240 = vpop.permute.xlu0 %239
        %v242 = vsub.f32 %v223, %v240
        %v243 = vmul.f32 %v242, 1.442695
        %v244 = vpow.pop %v243
        %245 = vadd.xlane.f32.xlu0 %v244
        %v246 = vpop.xlane.xlu0 %245
        %v247 = vadd.f32 %v236, %v246
        %vm248 = vcmask 7168
        %249 = vst.msk [vmem:[#allocation3] sm:$0xff] %vm248, %v247
        %250 = vst.msk [vmem:[#allocation2] sm:$0xff] %vm248, %v231
        %v251 = vld [vmem:[#allocation4] sm:$0xff]
        %v252 = vstv %s225
        %v253 = vsub.s32 %v224, %v252
        %254 = vset.pattern.permute.xlu0 0
        %255 = vperm.xlu0 %254, %v253
        %v256 = vpop.permute.xlu0 %255
        %vm257 = vcmp.eq.s32.totalorder %v227, %v256
        %v258 = vsel %vm257, %v223, 0.0
        %259 = vadd.xlane.f32.xlu0 %v258
        %v260 = vpop.xlane.xlu0 %259
        %v261 = vadd.f32 %v251, %v260
        %262 = vst.msk [vmem:[#allocation4] sm:$0xff] %vm248, %v261
        // Predicated region
        $region33: #{tpu_custom_call.1} parent=27 // pred_check
          %p263 = pneg %p215
        $region34: #{tpu_custom_call.1} parent=27 // pred_check_branch
          %265 = sbr.rel (%p263) target = $region36
        $region35: #{tpu_custom_call.1} parent=27 // pred_region
          %v266 = vlaneseq
          %v267 = vshrl.u32 %v266, 7
          %s268 = smul.u32 %s25, 8
          %v269 = vstv %s268
          %v270 = vadd.s32 %v267, %v269
          %vm271 = vcmp.ne.s32.totalorder %v224, 4294967196
          %vm272 = vcmp.lt.s32.totalorder %v270, 15
          %vm273 = vmand %vm271, %vm272
          %v274 = vld [vmem:[#allocation2] sm:$0xff]
          %v275 = vld [vmem:[#allocation3] sm:$0xff]
          %v276 = vlog2.pop %v275
          %v277 = vmul.f32 %v276, 0.6931472
          %v278 = vadd.f32 %v274, %v277
          %v279 = vld [vmem:[#allocation4] sm:$0xff]
          %v280 = vsub.f32 %v278, %v279
          %v281 = vsel %vm273, %v280, 0.0
          %v282 = vsel %vm248, %v281, 0.0
          %283 = vadd.xlane.f32.xlu0 %v282
          %v284 = vpop.xlane.xlu0 %283
          %v285 = vrot.slane %v284, 4
          %v286 = vadd.f32 %v284, %v285
          %v287 = vrot.slane %v286, 2
          %v288 = vadd.f32 %v286, %v287
          %v289 = vrot.slane %v288, 1
          %v290 = vadd.f32 %v288, %v289
          %s291 = vtos %v290
          %v292 = vstv %s291
          %293 = vst [vmem:[%s197] sm:$0x1] %v292
          %v294 = vsel %vm273, 1, 0
          %v295 = vcvt.s32.f32 %v294
          %v296 = vsel %vm248, %v295, 0.0
          %297 = vadd.xlane.f32.xlu0 %v296
          %v298 = vpop.xlane.xlu0 %297
          %v299 = vrot.slane %v298, 4
          %v300 = vadd.f32 %v298, %v299
          %v301 = vrot.slane %v300, 2
          %v302 = vadd.f32 %v300, %v301
          %v303 = vrot.slane %v302, 1
          %v304 = vadd.f32 %v302, %v303
          %s305 = vtos %v304
          %v306 = vstv %s305
          %307 = vst [vmem:[%s203] sm:$0x1] %v306
        $region36: #{tpu_custom_call.1} parent=27 // pred_fallthru
          _
        %s308 = sand.u32 %s95, 1
        %s309 = scalar_lea.sflag [#allocation6], %s308
        %s310 = sand.u32 %s95, 1
        %s311 = scalar_lea.vmem [#allocation5], %s310
        %s312 = sand.u32 %s121, 1
        %s313 = scalar_lea.sflag [#allocation8], %s312
        %s314 = sand.u32 %s121, 1
        %s315 = scalar_lea.vmem [#allocation7], %s314
        // Predicated region
        $region37: #{tpu_custom_call.1} parent=27 // pred_check
          %p316 = pneg %p105
        $region38: #{tpu_custom_call.1} parent=27 // pred_check_branch
          %318 = sbr.rel (%p316) target = $region40
        $region39: #{tpu_custom_call.1} parent=27 // pred_region
          %s320 = ssub.s32 16, 16
          %321 = vsyncadd %s309, %s320
          %s322 = smul.addr %s25, 16
          %s323 = scalar_lea.hbm %s2, %s322
          %s325 = sshll.u32 %s311, 4
          %s326 = int_to_ptr.vmem [resolvable:$true] %s325
          %328 = dma.vmem_to_hbm [thread:$0]  %s326, 16, %s323, %s309
        $region40: #{tpu_custom_call.1} parent=27 // pred_fallthru
          _
        // Predicated region
        $region41: #{tpu_custom_call.1} parent=27 // pred_check
          %p329 = pneg %p131
        $region42: #{tpu_custom_call.1} parent=27 // pred_check_branch
          %331 = sbr.rel (%p329) target = $region44
        $region43: #{tpu_custom_call.1} parent=27 // pred_region
          %s333 = ssub.s32 16, 16
          %334 = vsyncadd %s313, %s333
          %s335 = smul.addr %s25, 16
          %s336 = scalar_lea.hbm %s3, %s335
          %s338 = sshll.u32 %s315, 4
          %s339 = int_to_ptr.vmem [resolvable:$true] %s338
          %341 = dma.vmem_to_hbm [thread:$0]  %s339, 16, %s336, %s313
        $region44: #{tpu_custom_call.1} parent=27 // pred_fallthru
          _
      $region28: #{tpu_custom_call.1} parent=5 // pred_fallthru
        _
      %p342 = scmp.le.s32.totalorder 2, %s16
      // Predicated region
      $region45: #{tpu_custom_call.1} parent=5 // pred_check
        %p343 = pneg %p342
      $region46: #{tpu_custom_call.1} parent=5 // pred_check_branch
        %345 = sbr.rel (%p343) target = $region48
      $region47: #{tpu_custom_call.1} parent=5 // pred_region
        %s346 = ssub.s32 %s16, 2
        // Predicated region
        $region49: #{tpu_custom_call.1} parent=47 // pred_check
          %p347 = pneg %p111
        $region50: #{tpu_custom_call.1} parent=47 // pred_check_branch
          %349 = sbr.rel (%p347) target = $region52
        $region51: #{tpu_custom_call.1} parent=47 // pred_region
          %s350 = sand.u32 %s96, 1
          %s351 = scalar_lea.sflag [#allocation6], %s350
          %s352 = sand.u32 %s96, 1
          %s353 = scalar_lea.vmem [#allocation5], %s352
          %354 = dma.done %s351, 16
        $region52: #{tpu_custom_call.1} parent=47 // pred_fallthru
          _
        // Predicated region
        $region53: #{tpu_custom_call.1} parent=47 // pred_check
          %p355 = pneg %p137
        $region54: #{tpu_custom_call.1} parent=47 // pred_check_branch
          %357 = sbr.rel (%p355) target = $region56
        $region55: #{tpu_custom_call.1} parent=47 // pred_region
          %s358 = sand.u32 %s122, 1
          %s359 = scalar_lea.sflag [#allocation8], %s358
          %s360 = sand.u32 %s122, 1
          %s361 = scalar_lea.vmem [#allocation7], %s360
          %362 = dma.done %s359, 16
        $region56: #{tpu_custom_call.1} parent=47 // pred_fallthru
          _
      $region48: #{tpu_custom_call.1} parent=5 // pred_fallthru
        _
    $region6: #{tpu_custom_call.1} parent=1 // loop_footer
      %s20 = sadd.s32 1, %s16
    $region7: #{tpu_custom_call.1} parent=1 // loop_footer_branch
      %15 = sbr.rel target = $region3
    $region8: #{tpu_custom_call.1} parent=1 // loop_exit
      _
    %363 = vsyncpa [#allocation6], 1
    %s364 = scalar_lea.sflag [#allocation6], 1
    %365 = vsyncpa %s364, 1
    %366 = vsyncpa [#allocation8], 1
    %s367 = scalar_lea.sflag [#allocation8], 1
    %368 = vsyncpa %s367, 1

</llo_original>
